<compile_context>
chip_gen: v7x
topology: tpu7x:2x2x1
jax: 0.10.0
libtpu: 0.0.40
codegen_flags: <defaults>
</compile_context>

<pallas_src>
import numpy as np
import jax
import jax.numpy as jnp
from jax.experimental import pallas as pl
from jax.experimental.pallas import tpu as pltpu


def _vert2uv_kernel(vf_ref, idx_ref, bary_ref, valid_ref, out_ref):
    # vf_ref    : (1, C, V)  vertex features (transposed) for this batch elem
    # idx_ref   : (3, TP)    int32 vertex indices per pixel (P lane-dense)
    # bary_ref  : (3, TP)    f32 barycentric weights per pixel
    # valid_ref : (1, TP)    f32: 1.0 where pix_to_face != -1 else 0.0
    # out_ref   : (1, C, TP) NCHW-ready output slab
    vf_t = vf_ref[0].astype(jnp.float32)                      # (C, V)
    V = vf_t.shape[1]
    TP = idx_ref.shape[1]

    valid = valid_ref[...] > 0.0                              # (1, TP) bool
    iota_v = jax.lax.broadcasted_iota(jnp.int32, (V, TP), 0)  # vertex ids in sublanes

    def tap(k):
        idx_k = idx_ref[k:k + 1, :]                            # (1, TP) i32
        # Fold validity into the weights (where, not multiply -> NaN-safe).
        bary_k = jnp.where(valid, bary_ref[k:k + 1, :], 0.0)   # (1, TP) f32
        return jnp.where(idx_k == iota_v, bary_k, 0.0)         # (V, TP)

    # Barycentric scatter matrix: init from k=0, add k=1,2 (no zeros init).
    scatter = tap(0) + tap(1) + tap(2)

    # Gather + weighted sum as one MXU matmul, P stays lane-dense end to end.
    out = jnp.dot(vf_t, scatter, preferred_element_type=jnp.float32)  # (C, TP)
    out_ref[0] = out.astype(out_ref.dtype)


def _pick_tile_p(P, target):
    """Largest P-tile <= target that is a multiple of 128 and divides P."""
    if P <= target:
        return P
    tp = (target // 128) * 128
    while tp >= 128:
        if P % tp == 0:
            return tp
        tp -= 128
    return P  # fall back to full P (block == full dim is always legal)


def vert2uv_pallas(vert_feat, pix_to_vert_idx, bary_coords, is_valid,
                   uvmap_shape, *, tile_p=1024):
    """vert_feat: (B, V, C) f32
       pix_to_vert_idx: (H, W, 3) int32   (face table already resolved)
       bary_coords: (H, W, 3) f32
       is_valid: (H, W) bool
       returns (B, C, H, W) f32 (NCHW, matching the PyTorch module)."""
    B, V, C = vert_feat.shape
    H, W = uvmap_shape
    P = H * W

    # Layout plumbing: P becomes the lane (last) dim for every kernel operand.
    vf_t = jnp.transpose(vert_feat.astype(jnp.float32), (0, 2, 1))   # (B, C, V)
    idx = pix_to_vert_idx.reshape(P, 3).astype(jnp.int32).T          # (3, P)
    bary = bary_coords.reshape(P, 3).astype(jnp.float32).T           # (3, P)
    valid = is_valid.reshape(1, P).astype(jnp.float32)               # (1, P)

    TP = _pick_tile_p(P, tile_p)
    num_p_tiles = P // TP

    # Grid = (P-tiles, B) with B innermost: idx/bary/valid block indices are
    # unchanged across consecutive b steps (no redundant re-DMA of the large
    # P-scaled inputs); only the tiny (1, C, V) vf tile is refetched per b.
    # TODO(synk): at production vertex counts (V not VMEM-resident) add a
    # third "arbitrary" V-tile axis with an f32 VMEM accumulator.
    out = pl.pallas_call(
        _vert2uv_kernel,
        out_shape=jax.ShapeDtypeStruct((B, C, P), jnp.float32),
        grid_spec=pltpu.PrefetchScalarGridSpec(
            num_scalar_prefetch=0,
            grid=(num_p_tiles, B),
            in_specs=[
                pl.BlockSpec((1, C, V), lambda p, b: (b, 0, 0)),
                pl.BlockSpec((3, TP), lambda p, b: (0, p)),
                pl.BlockSpec((3, TP), lambda p, b: (0, p)),
                pl.BlockSpec((1, TP), lambda p, b: (0, p)),
            ],
            out_specs=pl.BlockSpec((1, C, TP), lambda p, b: (b, 0, p)),
        ),
        compiler_params=pltpu.CompilerParams(
            dimension_semantics=("parallel", "parallel"),
            vmem_limit_bytes=32 * 1024 * 1024,
        ),
    )(vf_t, idx, bary, valid)

    # Output is already channel-major; reshape (B, C, P) -> (B, C, H, W), free.
    return out.reshape(B, C, H, W)


def reference_vert2uv(vert_feat, pix_to_vert_idx, bary_coords, is_valid, uvmap_shape):
    B, V, C = vert_feat.shape
    H, W = uvmap_shape
    gathered = vert_feat[:, pix_to_vert_idx.reshape(-1), :].reshape(B, H, W, 3, C)
    summed = jnp.sum(gathered * bary_coords[None, :, :, :, None], axis=3)
    summed = summed.transpose(0, 3, 1, 2)
    return summed * is_valid[None, None, :, :].astype(summed.dtype)


if __name__ == "__main__":
    # Synthetic deterministic stand-ins for uhm.* / rasterization outputs.
    # TODO(synk): the real module gets pix_to_face / bary_coords from a UV
    # rasterizer (rasterize_to_uv) over uhm.vertex_uv/face_uv; here they are
    # synthesized deterministically with the same shapes/semantics.
    key = jax.random.PRNGKey(0)
    k1, k2, k3, k4 = jax.random.split(key, 4)

    B, V, C = 2, 32, 8          # batch, num vertices, feat_dim
    H, W = 16, 16               # uvmap_shape
    F = 48                      # number of faces

    # face table: (F, 3) vertex indices
    face = jax.random.randint(k1, (F, 3), 0, V, dtype=jnp.int32)

    # rasterizer outputs: pix_to_face in [-1, F), barycentric coords summing to 1
    pix_to_face = jax.random.randint(k2, (H, W), -1, F, dtype=jnp.int32)
    bary_raw = jax.random.uniform(k3, (H, W, 3), jnp.float32, 0.05, 1.0)
    bary_coords = bary_raw / jnp.sum(bary_raw, axis=-1, keepdims=True)

    is_valid = pix_to_face != -1
    # torch's long-tensor indexing wraps -1 to the last face; replicate that.
    pix_to_vert_idx = jnp.take(face, pix_to_face % F, axis=0)   # (H, W, 3)

    vert_feat = jax.random.normal(k4, (B, V, C), jnp.float32)

    # tile_p=128 -> P=256 is split into 2 pixel tiles, exercising the tiled path.
    out = vert2uv_pallas(vert_feat, pix_to_vert_idx, bary_coords, is_valid,
                         (H, W), tile_p=128)
    out = jax.block_until_ready(out)

    ref = reference_vert2uv(vert_feat, pix_to_vert_idx, bary_coords, is_valid, (H, W))
    np.testing.assert_allclose(np.asarray(out), np.asarray(ref), rtol=1e-5, atol=1e-5)

    assert out.shape == (B, C, H, W)
    print("KERNEL_OK")
</pallas_src>

<mosaic_0001>
module attributes {stable_mosaic.version = 11 : i64} {
  func.func @_vert2uv_kernel(%arg0: i32, %arg1: i32, %arg2: memref<1x8x32xf32, #tpu.memory_space<vmem>>, %arg3: memref<3x128xi32, #tpu.memory_space<vmem>>, %arg4: memref<3x128xf32, #tpu.memory_space<vmem>>, %arg5: memref<1x128xf32, #tpu.memory_space<vmem>>, %arg6: memref<1x8x128xf32, #tpu.memory_space<vmem>>) attributes {dimension_semantics = [#tpu.dimension_semantics<parallel>, #tpu.dimension_semantics<parallel>], iteration_bounds = array<i64: 2, 2>, scalar_prefetch = 0 : i64, scratch_operands = 0 : i64, tpu.core_type = #tpu.core_type<tc>, window_params = [{transform_indices = @transform_0, window_bounds = array<i64: 1, 8, 32>}, {transform_indices = @transform_1, window_bounds = array<i64: 3, 128>}, {transform_indices = @transform_2, window_bounds = array<i64: 3, 128>}, {transform_indices = @transform_3, window_bounds = array<i64: 1, 128>}, {transform_indices = @transform_4, window_bounds = array<i64: 1, 8, 128>}]} {
    %c0 = arith.constant 0 : index
    %c0_0 = arith.constant 0 : index
    %c0_1 = arith.constant 0 : index
    %0 = vector.load %arg2[%c0, %c0_0, %c0_1] : memref<1x8x32xf32, #tpu.memory_space<vmem>>, vector<1x8x32xf32>
    %1 = vector.shape_cast %0 : vector<1x8x32xf32> to vector<8x32xf32>
    %c0_2 = arith.constant 0 : index
    %c0_3 = arith.constant 0 : index
    %2 = vector.load %arg5[%c0_2, %c0_3] : memref<1x128xf32, #tpu.memory_space<vmem>>, vector<1x128xf32>
    %cst = arith.constant 0.000000e+00 : f32
    %3 = vector.broadcast %cst : f32 to vector<1x128xf32>
    %4 = arith.cmpf ogt, %2, %3 : vector<1x128xf32>
    %5 = tpu.iota {dimensions = array<i32: 0>} : vector<32x128xi32>
    %c0_4 = arith.constant 0 : index
    %c0_5 = arith.constant 0 : index
    %6 = vector.load %arg3[%c0_4, %c0_5] : memref<3x128xi32, #tpu.memory_space<vmem>>, vector<1x128xi32>
    %c0_6 = arith.constant 0 : index
    %c0_7 = arith.constant 0 : index
    %7 = vector.load %arg4[%c0_6, %c0_7] : memref<3x128xf32, #tpu.memory_space<vmem>>, vector<1x128xf32>
    %cst_8 = arith.constant 0.000000e+00 : f32
    %8 = vector.broadcast %cst_8 : f32 to vector<1x128xf32>
    %9 = arith.select %4, %7, %8 : vector<1x128xi1>, vector<1x128xf32>
    %10 = vector.broadcast %6 : vector<1x128xi32> to vector<32x128xi32>
    %11 = arith.cmpi eq, %10, %5 : vector<32x128xi32>
    %cst_9 = arith.constant 0.000000e+00 : f32
    %12 = vector.shape_cast %9 : vector<1x128xf32> to vector<1x128xf32>
    %13 = vector.broadcast %12 : vector<1x128xf32> to vector<32x128xf32>
    %14 = vector.broadcast %cst_9 : f32 to vector<32x128xf32>
    %15 = arith.select %11, %13, %14 : vector<32x128xi1>, vector<32x128xf32>
    %c1 = arith.constant 1 : index
    %c0_10 = arith.constant 0 : index
    %16 = vector.load %arg3[%c1, %c0_10] : memref<3x128xi32, #tpu.memory_space<vmem>>, vector<1x128xi32>
    %c1_11 = arith.constant 1 : index
    %c0_12 = arith.constant 0 : index
    %17 = vector.load %arg4[%c1_11, %c0_12] : memref<3x128xf32, #tpu.memory_space<vmem>>, vector<1x128xf32>
    %cst_13 = arith.constant 0.000000e+00 : f32
    %18 = vector.broadcast %cst_13 : f32 to vector<1x128xf32>
    %19 = arith.select %4, %17, %18 : vector<1x128xi1>, vector<1x128xf32>
    %20 = vector.broadcast %16 : vector<1x128xi32> to vector<32x128xi32>
    %21 = arith.cmpi eq, %20, %5 : vector<32x128xi32>
    %cst_14 = arith.constant 0.000000e+00 : f32
    %22 = vector.shape_cast %19 : vector<1x128xf32> to vector<1x128xf32>
    %23 = vector.broadcast %22 : vector<1x128xf32> to vector<32x128xf32>
    %24 = vector.broadcast %cst_14 : f32 to vector<32x128xf32>
    %25 = arith.select %21, %23, %24 : vector<32x128xi1>, vector<32x128xf32>
    %26 = arith.addf %15, %25 : vector<32x128xf32>
    %c2 = arith.constant 2 : index
    %c0_15 = arith.constant 0 : index
    %27 = vector.load %arg3[%c2, %c0_15] : memref<3x128xi32, #tpu.memory_space<vmem>>, vector<1x128xi32>
    %c2_16 = arith.constant 2 : index
    %c0_17 = arith.constant 0 : index
    %28 = vector.load %arg4[%c2_16, %c0_17] : memref<3x128xf32, #tpu.memory_space<vmem>>, vector<1x128xf32>
    %cst_18 = arith.constant 0.000000e+00 : f32
    %29 = vector.broadcast %cst_18 : f32 to vector<1x128xf32>
    %30 = arith.select %4, %28, %29 : vector<1x128xi1>, vector<1x128xf32>
    %31 = vector.broadcast %27 : vector<1x128xi32> to vector<32x128xi32>
    %32 = arith.cmpi eq, %31, %5 : vector<32x128xi32>
    %cst_19 = arith.constant 0.000000e+00 : f32
    %33 = vector.shape_cast %30 : vector<1x128xf32> to vector<1x128xf32>
    %34 = vector.broadcast %33 : vector<1x128xf32> to vector<32x128xf32>
    %35 = vector.broadcast %cst_19 : f32 to vector<32x128xf32>
    %36 = arith.select %32, %34, %35 : vector<32x128xi1>, vector<32x128xf32>
    %37 = arith.addf %26, %36 : vector<32x128xf32>
    %cst_20 = arith.constant dense<0.000000e+00> : vector<8x128xf32>
    %38 = tpu.matmul %1, %37, %cst_20 {dimension_numbers = #tpu.dot_dimension_numbers<[1], [0], [0], [1], [0, 0, 1, 1], [], []>} : vector<8x32xf32>, vector<32x128xf32>, vector<8x128xf32> -> vector<8x128xf32>
    %c0_21 = arith.constant 0 : index
    %c0_22 = arith.constant 0 : index
    %c0_23 = arith.constant 0 : index
    %39 = vector.load %arg6[%c0_21, %c0_22, %c0_23] : memref<1x8x128xf32, #tpu.memory_space<vmem>>, vector<1x8x128xf32>
    %40 = vector.shape_cast %39 : vector<1x8x128xf32> to vector<8x128xf32>
    %41 = vector.shape_cast %38 : vector<8x128xf32> to vector<1x8x128xf32>
    tpu.vector_store %arg6[%c0_21, %c0_22, %c0_23], %41 {strides = array<i32>} : memref<1x8x128xf32, #tpu.memory_space<vmem>>, vector<1x8x128xf32>,
    return
  }
  func.func @transform_0(%arg0: i32, %arg1: i32) -> (i32, i32, i32) {
    %c0_i32 = arith.constant 0 : i32
    %c0_i32_0 = arith.constant 0 : i32
    %c0_i32_1 = arith.constant 0 : i32
    return %arg1, %c0_i32, %c0_i32_0 : i32, i32, i32
  }
  func.func @transform_1(%arg0: i32, %arg1: i32) -> (i32, i32) {
    %c0_i32 = arith.constant 0 : i32
    %c0_i32_0 = arith.constant 0 : i32
    return %c0_i32, %arg0 : i32, i32
  }
  func.func @transform_2(%arg0: i32, %arg1: i32) -> (i32, i32) {
    %c0_i32 = arith.constant 0 : i32
    %c0_i32_0 = arith.constant 0 : i32
    return %c0_i32, %arg0 : i32, i32
  }
  func.func @transform_3(%arg0: i32, %arg1: i32) -> (i32, i32) {
    %c0_i32 = arith.constant 0 : i32
    %c0_i32_0 = arith.constant 0 : i32
    return %c0_i32, %arg0 : i32, i32
  }
  func.func @transform_4(%arg0: i32, %arg1: i32) -> (i32, i32, i32) {
    %c0_i32 = arith.constant 0 : i32
    %c0_i32_0 = arith.constant 0 : i32
    return %arg1, %c0_i32, %arg0 : i32, i32, i32
  }
}

</mosaic_0001>

<llo_original>
// kernel: tpu_custom_call.1
$region0: #{tpu_custom_call.1}
  #allocation0 [shape = 'u32[]', space=smem, size = 0x4, offset = 0x4, fixed_abs, tag = 'smem constant byte address 0x4 - core index']
  #allocation1 [shape = 'u32[144,128]{1,0:T(1,128)}', space=vmem, size = 0x12000, scoped, tag = 'internal scratch']
  %s0 = inlined_call_operand.hbm [shape: f32[2,8,32], index: 0, kind: input, shape index: {}]
  %s1 = inlined_call_operand.hbm [shape: s32[3,256], index: 1, kind: input, shape index: {}]
  %s2 = inlined_call_operand.hbm [shape: f32[3,256], index: 2, kind: input, shape index: {}]
  %s3 = inlined_call_operand.vmem [shape: f32[1,256], index: 3, kind: input, shape index: {}]
  %s4 = inlined_call_operand.hbm [shape: f32[2,8,256], index: 4, kind: output, shape index: {}]
  %s5 = sld [smem:[#allocation0]]
  $region61: #{tpu_custom_call.1} parent=0
    _
  %s7 = ssub.s32 1, %s5
  %s8 = scalar_select 0, %s7, %s5
  $region1: #{tpu_custom_call.1} parent=0
    #allocation2 [shape = 'u8[8192]{0}', space=vmem, size = 0x2000, scoped, tag = 'input window, operand 0']
    #allocation3 [shape = 's32[2]{0}', space=sflag, size = 0x8, scoped, tag = 'scoped memory for tpu_custom_call.1']
    #allocation4 [shape = 's32[2]{0}', space=sflag, size = 0x8, scoped, tag = 'scoped memory for tpu_custom_call.1']
    #allocation5 [shape = 'u8[4096]{0}', space=vmem, size = 0x1000, scoped, tag = 'input window, operand 1']
    #allocation6 [shape = 's32[2]{0}', space=sflag, size = 0x8, scoped, tag = 'scoped memory for tpu_custom_call.1']
    #allocation7 [shape = 'u8[4096]{0}', space=vmem, size = 0x1000, scoped, tag = 'input window, operand 2']
    #allocation8 [shape = 'u8[8192]{0}', space=vmem, size = 0x2000, scoped, tag = 'output window, operand 0']
    %9 = vsyncpa [#allocation3], 0
    %s10 = scalar_lea.sflag [#allocation3], 1
    %11 = vsyncpa %s10, 0
    %12 = vsyncpa [#allocation6], 0
    %s13 = scalar_lea.sflag [#allocation6], 1
    %14 = vsyncpa %s13, 0
    %15 = vsyncpa [#allocation4], 0
    %s16 = scalar_lea.sflag [#allocation4], 1
    %17 = vsyncpa %s16, 0
    loop: start=0, step=1, limit=6
    $region2: #{tpu_custom_call.1} parent=1 // loop_pre_header
      _
    $region3: #{tpu_custom_call.1} parent=1 // loop_header
      %s19 = sphi 0, %s23
      %p20 = scmp.ge.s32.totalorder %s19, 6
      %s26 = sphi 0, %s38
      %s27 = sphi 0, %s34
      %s28 = sphi 0, %s26
      %s29 = sphi 0, %s27
      %s30 = sphi 0, %s28
      %s31 = sphi 0, %s29
      %s41 = sphi 0, %s43
      %s44 = sphi 0, %s41
      %s45 = sphi 0, %s44
      %s61 = sphi 0, %s45
      %s67 = sphi 0, %s69
      %s70 = sphi 0, %s67
      %s71 = sphi 0, %s70
      %s87 = sphi 0, %s71
      %s93 = sphi 0, %s95
      %s96 = sphi 0, %s93
      %s97 = sphi 0, %s96
      %s113 = sphi 0, %s97
      %s119 = sphi 0, %s121
      %s122 = sphi 0, %s119
      %s123 = sphi 0, %s122
      %s139 = sphi 0, %s123
      %s147 = sphi 0, %s149
      %s150 = sphi 0, %s147
      %s151 = sphi 0, %s150
      %s167 = sphi 0, %s151
    $region4: #{tpu_custom_call.1} parent=1 // loop_header_branch
      %22 = sbr.rel (%p20) target = $region8
    $region5: #{tpu_custom_call.1} parent=1 // loop_body
      %s24 = ssub.s32 %s19, 1
      %s25 = ssub.s32 %s19, 2
      %s32 = sadd.s32 1, %s27
      %p33 = scmp.ge.s32.totalorder %s32, 2
      %s34 = scalar_select %p33, 0, %s32
      %s35 = sadd.s32 1, %s26
      %s36 = scalar_select %p33, %s35, %s26
      %p37 = scmp.ge.s32.totalorder %s36, 2
      %s38 = scalar_select %p37, 0, %s36
      %s39 = ssub.s32 %s27, %s34
      %p40 = scmp.eq.s32.totalorder %s39, 0
      %s42 = sadd.s32 %s41, 1
      %s43 = scalar_select %p40, %s41, %s42
      %p46 = pneg %p40
      %p47 = scmp.eq.s32.totalorder %s19, 3
      %p48 = por %p46, %p47
      %p49 = scmp.ne.s32.totalorder %s41, %s44
      %p50 = scmp.eq.s32.totalorder %s19, 0
      %p51 = por %p49, %p50
      %p52 = scmp.ne.s32.totalorder %s41, %s44
      %p53 = scmp.eq.s32.totalorder %s24, 3
      %p54 = por %p52, %p53
      %p55 = scmp.ne.s32.totalorder %s44, %s45
      %p56 = scmp.eq.s32.totalorder %s24, 0
      %p57 = por %p55, %p56
      %p58 = scmp.ne.s32.totalorder %s44, %s45
      %p59 = scmp.eq.s32.totalorder %s25, 3
      %p60 = por %p58, %p59
      %p62 = scmp.ne.s32.totalorder %s45, %s61
      %p63 = scmp.eq.s32.totalorder %s25, 0
      %p64 = por %p62, %p63
      %s65 = ssub.s32 %s26, %s38
      %p66 = scmp.eq.s32.totalorder %s65, 0
      %s68 = sadd.s32 %s67, 1
      %s69 = scalar_select %p66, %s67, %s68
      %p72 = pneg %p66
      %p73 = scmp.eq.s32.totalorder %s19, 3
      %p74 = por %p72, %p73
      %p75 = scmp.ne.s32.totalorder %s67, %s70
      %p76 = scmp.eq.s32.totalorder %s19, 0
      %p77 = por %p75, %p76
      %p78 = scmp.ne.s32.totalorder %s67, %s70
      %p79 = scmp.eq.s32.totalorder %s24, 3
      %p80 = por %p78, %p79
      %p81 = scmp.ne.s32.totalorder %s70, %s71
      %p82 = scmp.eq.s32.totalorder %s24, 0
      %p83 = por %p81, %p82
      %p84 = scmp.ne.s32.totalorder %s70, %s71
      %p85 = scmp.eq.s32.totalorder %s25, 3
      %p86 = por %p84, %p85
      %p88 = scmp.ne.s32.totalorder %s71, %s87
      %p89 = scmp.eq.s32.totalorder %s25, 0
      %p90 = por %p88, %p89
      %s91 = ssub.s32 %s26, %s38
      %p92 = scmp.eq.s32.totalorder %s91, 0
      %s94 = sadd.s32 %s93, 1
      %s95 = scalar_select %p92, %s93, %s94
      %p98 = pneg %p92
      %p99 = scmp.eq.s32.totalorder %s19, 3
      %p100 = por %p98, %p99
      %p101 = scmp.ne.s32.totalorder %s93, %s96
      %p102 = scmp.eq.s32.totalorder %s19, 0
      %p103 = por %p101, %p102
      %p104 = scmp.ne.s32.totalorder %s93, %s96
      %p105 = scmp.eq.s32.totalorder %s24, 3
      %p106 = por %p104, %p105
      %p107 = scmp.ne.s32.totalorder %s96, %s97
      %p108 = scmp.eq.s32.totalorder %s24, 0
      %p109 = por %p107, %p108
      %p110 = scmp.ne.s32.totalorder %s96, %s97
      %p111 = scmp.eq.s32.totalorder %s25, 3
      %p112 = por %p110, %p111
      %p114 = scmp.ne.s32.totalorder %s97, %s113
      %p115 = scmp.eq.s32.totalorder %s25, 0
      %p116 = por %p114, %p115
      %s117 = ssub.s32 %s26, %s38
      %p118 = scmp.eq.s32.totalorder %s117, 0
      %s120 = sadd.s32 %s119, 1
      %s121 = scalar_select %p118, %s119, %s120
      %p124 = pneg %p118
      %p125 = scmp.eq.s32.totalorder %s19, 3
      %p126 = por %p124, %p125
      %p127 = scmp.ne.s32.totalorder %s119, %s122
      %p128 = scmp.eq.s32.totalorder %s19, 0
      %p129 = por %p127, %p128
      %p130 = scmp.ne.s32.totalorder %s119, %s122
      %p131 = scmp.eq.s32.totalorder %s24, 3
      %p132 = por %p130, %p131
      %p133 = scmp.ne.s32.totalorder %s122, %s123
      %p134 = scmp.eq.s32.totalorder %s24, 0
      %p135 = por %p133, %p134
      %p136 = scmp.ne.s32.totalorder %s122, %s123
      %p137 = scmp.eq.s32.totalorder %s25, 3
      %p138 = por %p136, %p137
      %p140 = scmp.ne.s32.totalorder %s123, %s139
      %p141 = scmp.eq.s32.totalorder %s25, 0
      %p142 = por %p140, %p141
      %s143 = ssub.s32 %s27, %s34
      %s144 = ssub.s32 %s26, %s38
      %s145 = sor.u32 %s143, %s144
      %p146 = scmp.eq.s32.totalorder %s145, 0
      %s148 = sadd.s32 %s147, 1
      %s149 = scalar_select %p146, %s147, %s148
      %p152 = pneg %p146
      %p153 = scmp.eq.s32.totalorder %s19, 3
      %p154 = por %p152, %p153
      %p155 = scmp.ne.s32.totalorder %s147, %s150
      %p156 = scmp.eq.s32.totalorder %s19, 0
      %p157 = por %p155, %p156
      %p158 = scmp.ne.s32.totalorder %s147, %s150
      %p159 = scmp.eq.s32.totalorder %s24, 3
      %p160 = por %p158, %p159
      %p161 = scmp.ne.s32.totalorder %s150, %s151
      %p162 = scmp.eq.s32.totalorder %s24, 0
      %p163 = por %p161, %p162
      %p164 = scmp.ne.s32.totalorder %s150, %s151
      %p165 = scmp.eq.s32.totalorder %s25, 3
      %p166 = por %p164, %p165
      %p168 = scmp.ne.s32.totalorder %s151, %s167
      %p169 = scmp.eq.s32.totalorder %s25, 0
      %p170 = por %p168, %p169
      %p171 = scmp.le.s32.totalorder 1, %s19
      %p172 = scmp.lt.s32.totalorder %s19, 5
      %p173 = pnand %p171, %p172
      %p174 = pneg %p173
      // Predicated region
      $region9: #{tpu_custom_call.1} parent=5 // pred_check
        _
      $region10: #{tpu_custom_call.1} parent=5 // pred_check_branch
        %176 = sbr.rel (%p173) target = $region12
      $region11: #{tpu_custom_call.1} parent=5 // pred_region
        %s177 = ssub.s32 %s19, 1
      $region12: #{tpu_custom_call.1} parent=5 // pred_fallthru
        _
      %p178 = scmp.lt.s32.totalorder %s19, 4
      // Predicated region
      $region13: #{tpu_custom_call.1} parent=5 // pred_check
        %p179 = pneg %p178
      $region14: #{tpu_custom_call.1} parent=5 // pred_check_branch
        %181 = sbr.rel (%p179) target = $region16
      $region15: #{tpu_custom_call.1} parent=5 // pred_region
        // Predicated region
        $region17: #{tpu_custom_call.1} parent=15 // pred_check
          %p182 = pneg %p51
        $region18: #{tpu_custom_call.1} parent=15 // pred_check_branch
          %184 = sbr.rel (%p182) target = $region20
        $region19: #{tpu_custom_call.1} parent=15 // pred_region
          %s185 = sand.u32 %s41, 1
          %s186 = scalar_lea.sflag [#allocation3], %s185
          %s187 = sand.u32 %s41, 1
          %s188 = smul.addr %s187, 8
          %s189 = scalar_lea.vmem [#allocation2], %s188
          %s191 = ssub.s32 128, 128
          %192 = vsyncadd %s186, %s191
          %s193 = smul.addr %s27, 128
          %s194 = scalar_lea.hbm %s0, %s193
          %s196 = sshll.u32 %s189, 4
          %s197 = int_to_ptr.vmem [resolvable:$true] %s196
          %199 = dma.hbm_to_vmem [thread:$0]  %s194, 128, %s197, %s186
        $region20: #{tpu_custom_call.1} parent=15 // pred_fallthru
          _
        // Predicated region
        $region21: #{tpu_custom_call.1} parent=15 // pred_check
          %p200 = pneg %p77
        $region22: #{tpu_custom_call.1} parent=15 // pred_check_branch
          %202 = sbr.rel (%p200) target = $region24
        $region23: #{tpu_custom_call.1} parent=15 // pred_region
          %s203 = sand.u32 %s19, 1
          %s204 = scalar_lea.sflag [#allocation6], %s203
          %s205 = sand.u32 %s67, 1
          %s206 = smul.addr %s205, 4
          %s207 = scalar_lea.vmem [#allocation5], %s206
          %s209 = ssub.s32 64, 64
          %210 = vsyncadd %s204, %s209
          %s211 = smul.addr %s26, 64
          %s212 = scalar_lea.hbm %s1, %s211
          %s214 = sshll.u32 %s207, 4
          %s215 = int_to_ptr.vmem [resolvable:$true] %s214
          %217 = dma.hbm_to_vmem [thread:$0]  %s212, 64, %s215, %s204
        $region24: #{tpu_custom_call.1} parent=15 // pred_fallthru
          _
        // Predicated region
        $region25: #{tpu_custom_call.1} parent=15 // pred_check
          %p218 = pneg %p103
        $region26: #{tpu_custom_call.1} parent=15 // pred_check_branch
          %220 = sbr.rel (%p218) target = $region28
        $region27: #{tpu_custom_call.1} parent=15 // pred_region
          %s221 = sand.u32 %s19, 1
          %s222 = scalar_lea.sflag [#allocation6], %s221
          %s223 = sand.u32 %s93, 1
          %s224 = smul.addr %s223, 4
          %s225 = scalar_lea.vmem [#allocation7], %s224
          %s227 = ssub.s32 64, 64
          %228 = vsyncadd %s222, %s227
          %s229 = smul.addr %s26, 64
          %s230 = scalar_lea.hbm %s2, %s229
          %s232 = sshll.u32 %s225, 4
          %s233 = int_to_ptr.vmem [resolvable:$true] %s232
          %235 = dma.hbm_to_vmem [thread:$0]  %s230, 64, %s233, %s222
        $region28: #{tpu_custom_call.1} parent=15 // pred_fallthru
          _
        // Predicated region
        $region29: #{tpu_custom_call.1} parent=15 // pred_check
          %p236 = pneg %p129
        $region30: #{tpu_custom_call.1} parent=15 // pred_check_branch
          %238 = sbr.rel (%p236) target = $region32
        $region31: #{tpu_custom_call.1} parent=15 // pred_region
          %p239 = scmp.lt.s32.totalorder %s26, 1
          %s240 = scalar_select %p239, %s26, 1
          %s241 = scalar_lea.vmem %s3, %s240
        $region32: #{tpu_custom_call.1} parent=15 // pred_fallthru
          _
      $region16: #{tpu_custom_call.1} parent=5 // pred_fallthru
        _
      %p242 = scmp.le.s32.totalorder 1, %s19
      %p243 = scmp.lt.s32.totalorder %s19, 5
      %p244 = pnand %p242, %p243
      %p245 = pneg %p244
      // Predicated region
      $region33: #{tpu_custom_call.1} parent=5 // pred_check
        _
      $region34: #{tpu_custom_call.1} parent=5 // pred_check_branch
        %247 = sbr.rel (%p244) target = $region36
      $region35: #{tpu_custom_call.1} parent=5 // pred_region
        %s248 = ssub.s32 %s19, 1
        %s249 = sand.u32 %s44, 1
        %s250 = scalar_lea.sflag [#allocation3], %s249
        %s251 = sand.u32 %s44, 1
        %s252 = smul.addr %s251, 8
        %s253 = scalar_lea.vmem [#allocation2], %s252
        // Predicated region
        $region37: #{tpu_custom_call.1} parent=35 // pred_check
          %p254 = pneg %p57
        $region38: #{tpu_custom_call.1} parent=35 // pred_check_branch
          %256 = sbr.rel (%p254) target = $region40
        $region39: #{tpu_custom_call.1} parent=35 // pred_region
          %257 = dma.done %s250, 128
        $region40: #{tpu_custom_call.1} parent=35 // pred_fallthru
          _
        %s258 = sand.u32 %s24, 1
        %s259 = scalar_lea.sflag [#allocation6], %s258
        %s260 = sand.u32 %s70, 1
        %s261 = smul.addr %s260, 4
        %s262 = scalar_lea.vmem [#allocation5], %s261
        // Predicated region
        $region41: #{tpu_custom_call.1} parent=35 // pred_check
          %p263 = pneg %p83
        $region42: #{tpu_custom_call.1} parent=35 // pred_check_branch
          %265 = sbr.rel (%p263) target = $region44
        $region43: #{tpu_custom_call.1} parent=35 // pred_region
          %266 = dma.done %s259, 64
        $region44: #{tpu_custom_call.1} parent=35 // pred_fallthru
          _
        %s267 = sand.u32 %s24, 1
        %s268 = scalar_lea.sflag [#allocation6], %s267
        %s269 = sand.u32 %s96, 1
        %s270 = smul.addr %s269, 4
        %s271 = scalar_lea.vmem [#allocation7], %s270
        // Predicated region
        $region45: #{tpu_custom_call.1} parent=35 // pred_check
          %p272 = pneg %p109
        $region46: #{tpu_custom_call.1} parent=35 // pred_check_branch
          %274 = sbr.rel (%p272) target = $region48
        $region47: #{tpu_custom_call.1} parent=35 // pred_region
          %275 = dma.done %s268, 64
        $region48: #{tpu_custom_call.1} parent=35 // pred_fallthru
          _
        %s276 = sand.u32 %s44, 1
        %s277 = scalar_lea.sflag [#allocation3], %s276
        %s278 = sand.u32 %s44, 1
        %s279 = smul.addr %s278, 8
        %s280 = scalar_lea.vmem [#allocation2], %s279
        %p281 = pneg %p57
        %p282 = pneg %p54
        %s283 = sand.u32 %s24, 1
        %s284 = scalar_lea.sflag [#allocation6], %s283
        %s285 = sand.u32 %s70, 1
        %s286 = smul.addr %s285, 4
        %s287 = scalar_lea.vmem [#allocation5], %s286
        %p288 = pneg %p83
        %p289 = pneg %p80
        %s290 = sand.u32 %s24, 1
        %s291 = scalar_lea.sflag [#allocation6], %s290
        %s292 = sand.u32 %s96, 1
        %s293 = smul.addr %s292, 4
        %s294 = scalar_lea.vmem [#allocation7], %s293
        %p295 = pneg %p109
        %p296 = pneg %p106
        %p297 = scmp.lt.s32.totalorder %s28, 1
        %s298 = scalar_select %p297, %s28, 1
        %s299 = scalar_lea.vmem %s3, %s298
        %p300 = pneg %p135
        %p301 = pneg %p132
        %p302 = pneg %p163
        %p303 = pneg %p160
        %s304 = sand.u32 %s150, 1
        %s305 = scalar_lea.sflag [#allocation4], %s304
        %s306 = sand.u32 %s150, 1
        %s307 = smul.addr %s306, 8
        %s308 = scalar_lea.vmem [#allocation8], %s307
        %p309 = scmp.lt.s32.totalorder %s28, 1
        %s310 = scalar_select %p309, %s28, 1
        %s311 = scalar_lea.vmem %s3, %s310
        %v312 = vld [vmem:[%s253] sm:$0xff]
        %v313 = vld [vmem:[%s311] sm:$0x1]
        %vm314 = vcmp.gt.f32.partialorder %v313, 0.0
        %v315 = vlaneseq
        %v316 = vshrl.u32 %v315, 7
        %v317 = vadd.s32 %v316, 8
        %v318 = vadd.s32 %v316, 16
        %v319 = vadd.s32 %v316, 24
        %v320 = vld [vmem:[%s262] sm:$0x1]
        %v321 = vld [vmem:[%s271] sm:$0x1]
        %v322 = vsel %vm314, %v321, 0.0
        %v323 = vlaneseq
        %v324 = vshrl.u32 %v323, 7
        %v325 = vsub.s32 0, %v324
        %v326 = vrot.slane %v320, %v325
        %vm327 = vcmp.eq.s32.totalorder %v326, %v316
        %vm328 = vcmp.eq.s32.totalorder %v326, %v317
        %vm329 = vcmp.eq.s32.totalorder %v326, %v318
        %vm330 = vcmp.eq.s32.totalorder %v326, %v319
        %v332 = vlaneseq
        %v333 = vshrl.u32 %v332, 7
        %v334 = vsub.s32 0, %v333
        %v335 = vrot.slane %v322, %v334
        %v337 = vsel %vm327, %v335, 0.0
        %v338 = vsel %vm328, %v335, 0.0
        %v339 = vsel %vm329, %v335, 0.0
        %v340 = vsel %vm330, %v335, 0.0
        %v341 = vld [vmem:[%s262 + $0x1] sm:$0x1]
        %v342 = vld [vmem:[%s271 + $0x1] sm:$0x1]
        %v343 = vsel %vm314, %v342, 0.0
        %v344 = vlaneseq
        %v345 = vshrl.u32 %v344, 7
        %v346 = vsub.s32 0, %v345
        %v347 = vrot.slane %v341, %v346
        %vm348 = vcmp.eq.s32.totalorder %v347, %v316
        %vm349 = vcmp.eq.s32.totalorder %v347, %v317
        %vm350 = vcmp.eq.s32.totalorder %v347, %v318
        %vm351 = vcmp.eq.s32.totalorder %v347, %v319
        %v353 = vlaneseq
        %v354 = vshrl.u32 %v353, 7
        %v355 = vsub.s32 0, %v354
        %v356 = vrot.slane %v343, %v355
        %v358 = vsel %vm348, %v356, 0.0
        %v359 = vsel %vm349, %v356, 0.0
        %v360 = vsel %vm350, %v356, 0.0
        %v361 = vsel %vm351, %v356, 0.0
        %v362 = vadd.f32 %v337, %v358
        %v363 = vadd.f32 %v338, %v359
        %v364 = vadd.f32 %v339, %v360
        %v365 = vadd.f32 %v340, %v361
        %v366 = vld [vmem:[%s262 + $0x2] sm:$0x1]
        %v367 = vld [vmem:[%s271 + $0x2] sm:$0x1]
        %v368 = vsel %vm314, %v367, 0.0
        %v369 = vlaneseq
        %v370 = vshrl.u32 %v369, 7
        %v371 = vsub.s32 0, %v370
        %v372 = vrot.slane %v366, %v371
        %vm373 = vcmp.eq.s32.totalorder %v372, %v316
        %vm374 = vcmp.eq.s32.totalorder %v372, %v317
        %vm375 = vcmp.eq.s32.totalorder %v372, %v318
        %vm376 = vcmp.eq.s32.totalorder %v372, %v319
        %v378 = vlaneseq
        %v379 = vshrl.u32 %v378, 7
        %v380 = vsub.s32 0, %v379
        %v381 = vrot.slane %v368, %v380
        %v383 = vsel %vm373, %v381, 0.0
        %v384 = vsel %vm374, %v381, 0.0
        %v385 = vsel %vm375, %v381, 0.0
        %v386 = vsel %vm376, %v381, 0.0
        %v387 = vadd.f32 %v362, %v383
        %v388 = vadd.f32 %v363, %v384
        %v389 = vadd.f32 %v364, %v385
        %v390 = vadd.f32 %v365, %v386
        %vm391 = vcmask 261120
        %v393 = vsel %vm391, %v312, 0
        %395 = vmatprep.subr.mxu0 0.0
        %396 = vmatpush1.msra.mxu0 %v387
        %397 = vmatprep.subr.mxu0 0.0
        %398 = vmatpush1.msra.mxu0 %v388
        %399 = vmatprep.subr.mxu0 0.0
        %400 = vmatpush1.msra.mxu0 %v389
        %401 = vmatprep.subr.mxu0 0.0
        %402 = vmatpush1.msra.mxu0 %v390
        %403 = vmatprep.subr.mxu0 0.0
        %404 = vmatpush1.msra.mxu0 0.0
        %405 = vmatprep.subr.mxu0 0.0
        %406 = vmatpush1.msra.mxu0 0.0
        %407 = vmatprep.subr.mxu0 0.0
        %408 = vmatpush1.msra.mxu0 0.0
        %409 = vmatprep.subr.mxu0 0.0
        %410 = vmatpush1.msra.mxu0 0.0
        %411 = vmatprep.subr.mxu0 0.0
        %412 = vmatpush1.msra.mxu0 0.0
        %413 = vmatprep.subr.mxu0 0.0
        %414 = vmatpush1.msra.mxu0 0.0
        %415 = vmatprep.subr.mxu0 0.0
        %416 = vmatpush1.msra.mxu0 0.0
        %417 = vmatprep.subr.mxu0 0.0
        %418 = vmatpush1.msra.mxu0 0.0
        %419 = vmatprep.subr.mxu0 0.0
        %420 = vmatpush1.msra.mxu0 0.0
        %421 = vmatprep.subr.mxu0 0.0
        %422 = vmatpush1.msra.mxu0 0.0
        %423 = vmatprep.subr.mxu0 0.0
        %424 = vmatpush1.msra.mxu0 0.0
        %425 = vmatprep.subr.mxu0 0.0
        %426 = vmatpush1.msra.mxu0 0.0
        %427 = vmatprep.subr.mxu0 0.0
        %428 = vmatpush1.msra.mxu0 0.0
        %429 = vmatprep.subr.mxu0 0.0
        %430 = vmatpush1.msra.mxu0 0.0
        %431 = vmatprep.subr.mxu0 0.0
        %432 = vmatpush1.msra.mxu0 0.0
        %433 = vmatprep.subr.mxu0 0.0
        %434 = vmatpush1.msra.mxu0 0.0
        %435 = vmatprep.subr.mxu0 0.0
        %436 = vmatpush1.msra.mxu0 0.0
        %437 = vmatprep.subr.mxu0 0.0
        %438 = vmatpush1.msra.mxu0 0.0
        %439 = vmatprep.subr.mxu0 0.0
        %440 = vmatpush1.msra.mxu0 0.0
        %441 = vmatprep.subr.mxu0 0.0
        %442 = vmatpush1.msra.mxu0 0.0
        %443 = vmatprep.subr.mxu0 0.0
        %444 = vmatpush1.msra.mxu0 0.0
        %445 = vmatprep.subr.mxu0 0.0
        %446 = vmatpush1.msra.mxu0 0.0
        %447 = vmatprep.subr.mxu0 0.0
        %448 = vmatpush1.msra.mxu0 0.0
        %449 = vmatprep.subr.mxu0 0.0
        %450 = vmatpush1.msra.mxu0 0.0
        %451 = vmatprep.subr.mxu0 0.0
        %452 = vmatpush1.msra.mxu0 0.0
        %453 = vmatprep.subr.mxu0 0.0
        %454 = vmatpush1.msra.mxu0 0.0
        %455 = vmatprep.subr.mxu0 0.0
        %456 = vmatpush1.msra.mxu0 0.0
        %457 = vmatprep.subr.mxu0 0.0
        %458 = vmatpush1.msra.mxu0 0.0
        %459 = vmatprep.mubr.f32.mxu0 0.0
        %460 = vmatmul.mubr.f32.gmra.mrb[0].mxu0 %v393
        %v461 = vpop.f32.mrb[0].mxu0
        %v462 = vadd.f32 0.0, %v461
        %v463 = vpop.f32.mrb[0].mxu0
        %464 = vdwg.mxu0
        %465 = vst [vmem:[%s308] sm:$0xff] %v462
        %s466 = sand.u32 %s150, 1
        %s467 = scalar_lea.sflag [#allocation4], %s466
        %s468 = sand.u32 %s150, 1
        %s469 = smul.addr %s468, 8
        %s470 = scalar_lea.vmem [#allocation8], %s469
        // Predicated region
        $region49: #{tpu_custom_call.1} parent=35 // pred_check
          %p471 = pneg %p160
        $region50: #{tpu_custom_call.1} parent=35 // pred_check_branch
          %473 = sbr.rel (%p471) target = $region52
        $region51: #{tpu_custom_call.1} parent=35 // pred_region
          %s475 = ssub.s32 128, 128
          %476 = vsyncadd %s467, %s475
          %s477 = smul.addr %s29, 2
          %s478 = sadd.s32 %s28, %s477
          %s479 = smul.addr %s478, 128
          %s480 = scalar_lea.hbm %s4, %s479
          %s482 = sshll.u32 %s470, 4
          %s483 = int_to_ptr.vmem [resolvable:$true] %s482
          %485 = dma.vmem_to_hbm [thread:$0]  %s483, 128, %s480, %s467
        $region52: #{tpu_custom_call.1} parent=35 // pred_fallthru
          _
      $region36: #{tpu_custom_call.1} parent=5 // pred_fallthru
        _
      %p486 = scmp.le.s32.totalorder 2, %s19
      // Predicated region
      $region53: #{tpu_custom_call.1} parent=5 // pred_check
        %p487 = pneg %p486
      $region54: #{tpu_custom_call.1} parent=5 // pred_check_branch
        %489 = sbr.rel (%p487) target = $region56
      $region55: #{tpu_custom_call.1} parent=5 // pred_region
        %s490 = ssub.s32 %s19, 2
        // Predicated region
        $region57: #{tpu_custom_call.1} parent=55 // pred_check
          %p491 = pneg %p166
        $region58: #{tpu_custom_call.1} parent=55 // pred_check_branch
          %493 = sbr.rel (%p491) target = $region60
        $region59: #{tpu_custom_call.1} parent=55 // pred_region
          %s494 = sand.u32 %s151, 1
          %s495 = scalar_lea.sflag [#allocation4], %s494
          %s496 = sand.u32 %s151, 1
          %s497 = smul.addr %s496, 8
          %s498 = scalar_lea.vmem [#allocation8], %s497
          %499 = dma.done %s495, 128
        $region60: #{tpu_custom_call.1} parent=55 // pred_fallthru
          _
      $region56: #{tpu_custom_call.1} parent=5 // pred_fallthru
        _
    $region6: #{tpu_custom_call.1} parent=1 // loop_footer
      %s23 = sadd.s32 1, %s19
    $region7: #{tpu_custom_call.1} parent=1 // loop_footer_branch
      %18 = sbr.rel target = $region3
    $region8: #{tpu_custom_call.1} parent=1 // loop_exit
      _
    %500 = vsyncpa [#allocation3], 1
    %s501 = scalar_lea.sflag [#allocation3], 1
    %502 = vsyncpa %s501, 1
    %503 = vsyncpa [#allocation6], 1
    %s504 = scalar_lea.sflag [#allocation6], 1
    %505 = vsyncpa %s504, 1
    %506 = vsyncpa [#allocation4], 1
    %s507 = scalar_lea.sflag [#allocation4], 1
    %508 = vsyncpa %s507, 1

</llo_original>
